<compile_context>
chip_gen: v5e
topology: v5e:2x2
jax: 0.10.0
libtpu: 0.0.40
codegen_flags: <defaults>
</compile_context>

<pallas_src>
import jax
import jax.numpy as jnp
from jax.experimental import pallas as pl
from jax.experimental.pallas import tpu as pltpu

BN_EPS = 1e-5


def _make_kernel(bt, hout, kh, lane_in, lane_out):
    def kernel(x_ref, dw_ref, pw_ref, b_ref, o_ref):
        # Depthwise (9,1) "valid" conv over H.  Each tap is read straight from
        # the ref (cheap vlds that pipeline under the VPU MACs) instead of
        # loading the whole tile once and slicing the materialized array.
        # TODO(synk): if profiling on v7x shows the VPU slot binding, fold the
        # 9 taps into the MXU (9 accumulated matmuls against per-tap
        # row-scaled block-diagonal matrices) or run the MACs in bf16.
        acc = x_ref[:, 0:hout, :] * dw_ref[0]
        for k in range(1, kh):                           # static unroll, KH=9
            acc = acc + x_ref[:, k:k + hout, :] * dw_ref[k]

        # Pointwise 1x1 conv + folded BatchNorm + bias as a single MXU matmul
        # against the block-diagonal (Cin*W, Cout*W) matrix.  Mosaic's matmul
        # wants 2-D operands, so keep an explicit 2-D view; the reshapes are
        # layout-free whenever Hout % 8 == 0 (true at the demo shapes).
        a2 = acc.reshape(bt * hout, lane_in)
        y = jnp.dot(a2, pw_ref[...], preferred_element_type=jnp.float32)
        y = y + b_ref[...]
        o_ref[...] = jnp.maximum(y, 0.0).reshape(bt, hout, lane_out)

    return kernel


def _tpu_generation_params():
    """Return (vmem_limit_bytes, min_grid_steps) for the local TPU generation."""
    try:
        kind = jax.devices()[0].device_kind.lower()
    except Exception:
        kind = ""
    if "v7" in kind:
        return 48 * 2**20, 4      # 64 MiB physical VMEM, 2 TensorCores/chip
    if "v5" in kind or "v6" in kind:
        return 100 * 2**20, 2     # 128 MiB physical VMEM, 1 TensorCore
    return 48 * 2**20, 2          # conservative default for unknown chips


def separable_forward(x, params):
    """Forward pass of `Separable` (inference-mode BatchNorm).

    x: (B, Cin, H, W) float32 NCHW (same as the PyTorch module input).
    Returns (B, Cout, Hout, W) with Hout = H - KH + 1 (valid conv over H).
    """
    f32 = jnp.float32
    B, Cin, H, W = x.shape

    dw = params["dw_w"][:, 0, :, 0].astype(f32)           # (Cin, KH) depthwise taps
    dwb = params["dw_b"].astype(f32)                      # (Cin,)
    pw = params["pw_w"][:, :, 0, 0].astype(f32)           # (Cout, Cin)
    pwb = params["pw_b"].astype(f32)                      # (Cout,)
    gamma, beta, mean, var = (p.astype(f32) for p in params["bn"])

    Cout = pw.shape[0]
    KH = dw.shape[1]
    Hout = H - KH + 1
    lane_in, lane_out = Cin * W, Cout * W

    # ---- host-side folding (trace time; free at run time) ------------------
    #   relu( scale*(pw @ (dwconv(x)+dwb) + pwb) + shift )
    # = relu( (scale*pw) @ dwconv_nobias(x) + [scale*(pw@dwb + pwb) + shift] )
    # TODO(synk): inference-mode BN only (running stats); training-mode batch
    # statistics are out of scope for this forward kernel.
    scale = gamma * jax.lax.rsqrt(var + BN_EPS)
    shift = beta - mean * scale
    pw_f = (pw * scale[:, None]).T                        # (Cin, Cout)
    b_f = scale * (pwb + pw @ dwb) + shift                # (Cout,)

    # Flat-lane layout: activation lanes (c, w) -> c*W + w; output lanes
    # (o, w) -> o*W + w.  Pointwise conv becomes a block-diagonal matmul.
    # Lane-width guard: lane_out is a multiple of 128 here (unmasked stores);
    # lane_in = 64 only half-fills vregs on the depthwise stage (acceptable at
    # these shapes; pack rows into lanes if production Cin*W stays < 128).
    # TODO(synk): pw_big scales as W^2 and inflates MXU work by a factor W; for
    # large W switch to w-major lanes (w*Cin + c) and grid-tile W with a small
    # constant (Cin*Wt, Cout*Wt) weight block, and/or cast weights to bf16.
    pw_big = jnp.kron(pw_f, jnp.eye(W, dtype=f32))         # (Cin*W, Cout*W)
    b_big = jnp.repeat(b_f, W).reshape(1, lane_out)        # (1, Cout*W)
    dw_taps = jnp.repeat(dw.T, W, axis=1)                  # (KH, Cin*W): [k, c*W+w] = dw[c, k]

    # Activation: NCHW -> lane-dense (B, H, Cin*W).
    # TODO(synk): on v5e push this transpose into the producer (or enable
    # CompilerParams(allow_input_fusion) on the activation operand) and keep
    # the output lane-dense for the consumer to save two full HBM passes.
    x_f = jnp.transpose(x.astype(f32), (0, 2, 1, 3)).reshape(B, H, lane_in)

    # ---- generation-aware batch tiling -------------------------------------
    vmem_limit, min_steps = _tpu_generation_params()
    stream_bytes = 4 * (H * lane_in + Hout * lane_out)          # per batch row (in + out)
    resident_bytes = 4 * (KH * lane_in + lane_in * lane_out + lane_out)
    assert resident_bytes <= vmem_limit // 4, (
        f"folded pointwise matrix ({resident_bytes} B) exceeds the resident "
        f"VMEM budget; use w-major lane packing + W grid tiling for this W")

    headroom = 4 * 2**20
    avail = max(vmem_limit - resident_bytes - headroom, 2 * stream_bytes)
    bt_budget = max(1, avail // (2 * stream_bytes))             # x2: double-buffered stream
    # Force >= min_steps grid steps (when B allows) so the pipeline and the
    # v7x megacore sharding have work to overlap / split.
    bt = int(max(1, min(B, bt_budget, pl.cdiv(B, min_steps))))
    n_bt = pl.cdiv(B, bt)
    # No host-side padding: if B % bt != 0, Pallas handles the ragged last
    # block (out-of-bounds rows are masked on store).

    resident = dict(pipeline_mode=pl.Buffered(1))  # weights: single VMEM buffer

    kernel = _make_kernel(bt, Hout, KH, lane_in, lane_out)

    out_flat = pl.pallas_call(
        kernel,
        out_shape=jax.ShapeDtypeStruct((B, Hout, lane_out), f32),
        grid=(n_bt,),
        in_specs=[
            pl.BlockSpec((bt, H, lane_in), lambda i: (i, 0, 0)),          # streamed
            pl.BlockSpec((KH, lane_in), lambda i: (0, 0), **resident),    # resident
            pl.BlockSpec((lane_in, lane_out), lambda i: (0, 0), **resident),
            pl.BlockSpec((1, lane_out), lambda i: (0, 0), **resident),
        ],
        out_specs=pl.BlockSpec((bt, Hout, lane_out), lambda i: (i, 0, 0)),
        compiler_params=pltpu.CompilerParams(
            dimension_semantics=("parallel",),      # megacore sharding on v7x
            vmem_limit_bytes=int(vmem_limit),       # 48 MiB v7x / 100 MiB v5e-v6e
        ),
    )(x_f, dw_taps, pw_big, b_big)

    out = out_flat.reshape(B, Hout, Cout, W)
    return jnp.transpose(out, (0, 2, 1, 3))               # NCHW: (B, Cout, Hout, W)


def _reference(x, params):
    """Pure-jnp reference of the PyTorch forward (inference-mode BN)."""
    f32 = jnp.float32
    dw = params["dw_w"][:, 0, :, 0].astype(f32)
    dwb = params["dw_b"].astype(f32)
    pw = params["pw_w"][:, :, 0, 0].astype(f32)
    pwb = params["pw_b"].astype(f32)
    gamma, beta, mean, var = (p.astype(f32) for p in params["bn"])

    B, Cin, H, W = x.shape
    KH = dw.shape[1]
    Hout = H - KH + 1

    d = jnp.zeros((B, Cin, Hout, W), f32)
    for k in range(KH):
        d = d + x[:, :, k:k + Hout, :].astype(f32) * dw[:, k][None, :, None, None]
    d = d + dwb[None, :, None, None]

    p = jnp.einsum("bchw,oc->bohw", d, pw) + pwb[None, :, None, None]
    scale = gamma / jnp.sqrt(var + BN_EPS)
    shift = beta - mean * scale
    y = p * scale[None, :, None, None] + shift[None, :, None, None]
    return jnp.maximum(y, 0.0)


if __name__ == "__main__":
    key = jax.random.PRNGKey(0)
    ks = jax.random.split(key, 5)
    f32 = jnp.float32

    B, Cin, Cout, H, W, KH = 2, 4, 8, 16, 16, 9

    x = jax.random.normal(ks[0], (B, Cin, H, W), dtype=f32)
    params = {
        "dw_w": jax.random.normal(ks[1], (Cin, 1, KH, 1), f32) * 0.2,
        "dw_b": jax.random.normal(ks[2], (Cin,), f32) * 0.1,
        "pw_w": jax.random.normal(ks[3], (Cout, Cin, 1, 1), f32) * 0.3,
        "pw_b": jax.random.normal(ks[4], (Cout,), f32) * 0.1,
        # BatchNorm (gamma, beta, running_mean, running_var), deterministic.
        "bn": (1.0 + 0.1 * jnp.arange(Cout, dtype=f32),
               0.05 * jnp.arange(Cout, dtype=f32),
               0.01 * jnp.arange(Cout, dtype=f32),
               1.0 + 0.02 * jnp.arange(Cout, dtype=f32)),
    }

    fwd = jax.jit(separable_forward)
    out = fwd(x, params)
    jax.block_until_ready(out)
    assert out.shape == (B, Cout, H - KH + 1, W), out.shape

    ref = _reference(x, params)
    err = float(jnp.max(jnp.abs(out - ref)))
    assert jnp.allclose(out, ref, rtol=1e-3, atol=1e-3), err

    print("KERNEL_OK")
</pallas_src>

<mosaic_0001>
module attributes {stable_mosaic.version = 11 : i64} {
  func.func @kernel(%arg0: i32, %arg1: memref<1x16x64xf32, #tpu.memory_space<vmem>>, %arg2: memref<9x64xf32, #tpu.memory_space<vmem>>, %arg3: memref<64x128xf32, #tpu.memory_space<vmem>>, %arg4: memref<1x128xf32, #tpu.memory_space<vmem>>, %arg5: memref<1x8x128xf32, #tpu.memory_space<vmem>>) attributes {dimension_semantics = [#tpu.dimension_semantics<parallel>], iteration_bounds = array<i64: 2>, scalar_prefetch = 0 : i64, scratch_operands = 0 : i64, tpu.core_type = #tpu.core_type<tc>, window_params = [{transform_indices = @transform_0, window_bounds = array<i64: 1, 16, 64>}, {pipeline_mode = #tpu.pipeline_mode<synchronous>, transform_indices = @transform_1, window_bounds = array<i64: 9, 64>}, {pipeline_mode = #tpu.pipeline_mode<synchronous>, transform_indices = @transform_2, window_bounds = array<i64: 64, 128>}, {pipeline_mode = #tpu.pipeline_mode<synchronous>, transform_indices = @transform_3, window_bounds = array<i64: 1, 128>}, {transform_indices = @transform_4, window_bounds = array<i64: 1, 8, 128>}]} {
    %c0 = arith.constant 0 : index
    %c0_0 = arith.constant 0 : index
    %c0_1 = arith.constant 0 : index
    %0 = vector.load %arg1[%c0, %c0_0, %c0_1] : memref<1x16x64xf32, #tpu.memory_space<vmem>>, vector<1x8x64xf32>
    %c0_2 = arith.constant 0 : index
    %c0_3 = arith.constant 0 : index
    %1 = vector.load %arg2[%c0_2, %c0_3] : memref<9x64xf32, #tpu.memory_space<vmem>>, vector<1x64xf32>
    %2 = vector.shape_cast %1 : vector<1x64xf32> to vector<64xf32>
    %3 = vector.shape_cast %2 : vector<64xf32> to vector<1x1x64xf32>
    %4 = vector.broadcast %3 : vector<1x1x64xf32> to vector<1x8x64xf32>
    %5 = arith.mulf %0, %4 : vector<1x8x64xf32>
    %c0_4 = arith.constant 0 : index
    %c1 = arith.constant 1 : index
    %c0_5 = arith.constant 0 : index
    %6 = vector.load %arg1[%c0_4, %c1, %c0_5] : memref<1x16x64xf32, #tpu.memory_space<vmem>>, vector<1x8x64xf32>
    %c1_6 = arith.constant 1 : index
    %c0_7 = arith.constant 0 : index
    %7 = vector.load %arg2[%c1_6, %c0_7] : memref<9x64xf32, #tpu.memory_space<vmem>>, vector<1x64xf32>
    %8 = vector.shape_cast %7 : vector<1x64xf32> to vector<64xf32>
    %9 = vector.shape_cast %8 : vector<64xf32> to vector<1x1x64xf32>
    %10 = vector.broadcast %9 : vector<1x1x64xf32> to vector<1x8x64xf32>
    %11 = arith.mulf %6, %10 : vector<1x8x64xf32>
    %12 = arith.addf %5, %11 : vector<1x8x64xf32>
    %c0_8 = arith.constant 0 : index
    %c2 = arith.constant 2 : index
    %c0_9 = arith.constant 0 : index
    %13 = vector.load %arg1[%c0_8, %c2, %c0_9] : memref<1x16x64xf32, #tpu.memory_space<vmem>>, vector<1x8x64xf32>
    %c2_10 = arith.constant 2 : index
    %c0_11 = arith.constant 0 : index
    %14 = vector.load %arg2[%c2_10, %c0_11] : memref<9x64xf32, #tpu.memory_space<vmem>>, vector<1x64xf32>
    %15 = vector.shape_cast %14 : vector<1x64xf32> to vector<64xf32>
    %16 = vector.shape_cast %15 : vector<64xf32> to vector<1x1x64xf32>
    %17 = vector.broadcast %16 : vector<1x1x64xf32> to vector<1x8x64xf32>
    %18 = arith.mulf %13, %17 : vector<1x8x64xf32>
    %19 = arith.addf %12, %18 : vector<1x8x64xf32>
    %c0_12 = arith.constant 0 : index
    %c3 = arith.constant 3 : index
    %c0_13 = arith.constant 0 : index
    %20 = vector.load %arg1[%c0_12, %c3, %c0_13] : memref<1x16x64xf32, #tpu.memory_space<vmem>>, vector<1x8x64xf32>
    %c3_14 = arith.constant 3 : index
    %c0_15 = arith.constant 0 : index
    %21 = vector.load %arg2[%c3_14, %c0_15] : memref<9x64xf32, #tpu.memory_space<vmem>>, vector<1x64xf32>
    %22 = vector.shape_cast %21 : vector<1x64xf32> to vector<64xf32>
    %23 = vector.shape_cast %22 : vector<64xf32> to vector<1x1x64xf32>
    %24 = vector.broadcast %23 : vector<1x1x64xf32> to vector<1x8x64xf32>
    %25 = arith.mulf %20, %24 : vector<1x8x64xf32>
    %26 = arith.addf %19, %25 : vector<1x8x64xf32>
    %c0_16 = arith.constant 0 : index
    %c4 = arith.constant 4 : index
    %c0_17 = arith.constant 0 : index
    %27 = vector.load %arg1[%c0_16, %c4, %c0_17] : memref<1x16x64xf32, #tpu.memory_space<vmem>>, vector<1x8x64xf32>
    %c4_18 = arith.constant 4 : index
    %c0_19 = arith.constant 0 : index
    %28 = vector.load %arg2[%c4_18, %c0_19] : memref<9x64xf32, #tpu.memory_space<vmem>>, vector<1x64xf32>
    %29 = vector.shape_cast %28 : vector<1x64xf32> to vector<64xf32>
    %30 = vector.shape_cast %29 : vector<64xf32> to vector<1x1x64xf32>
    %31 = vector.broadcast %30 : vector<1x1x64xf32> to vector<1x8x64xf32>
    %32 = arith.mulf %27, %31 : vector<1x8x64xf32>
    %33 = arith.addf %26, %32 : vector<1x8x64xf32>
    %c0_20 = arith.constant 0 : index
    %c5 = arith.constant 5 : index
    %c0_21 = arith.constant 0 : index
    %34 = vector.load %arg1[%c0_20, %c5, %c0_21] : memref<1x16x64xf32, #tpu.memory_space<vmem>>, vector<1x8x64xf32>
    %c5_22 = arith.constant 5 : index
    %c0_23 = arith.constant 0 : index
    %35 = vector.load %arg2[%c5_22, %c0_23] : memref<9x64xf32, #tpu.memory_space<vmem>>, vector<1x64xf32>
    %36 = vector.shape_cast %35 : vector<1x64xf32> to vector<64xf32>
    %37 = vector.shape_cast %36 : vector<64xf32> to vector<1x1x64xf32>
    %38 = vector.broadcast %37 : vector<1x1x64xf32> to vector<1x8x64xf32>
    %39 = arith.mulf %34, %38 : vector<1x8x64xf32>
    %40 = arith.addf %33, %39 : vector<1x8x64xf32>
    %c0_24 = arith.constant 0 : index
    %c6 = arith.constant 6 : index
    %c0_25 = arith.constant 0 : index
    %41 = vector.load %arg1[%c0_24, %c6, %c0_25] : memref<1x16x64xf32, #tpu.memory_space<vmem>>, vector<1x8x64xf32>
    %c6_26 = arith.constant 6 : index
    %c0_27 = arith.constant 0 : index
    %42 = vector.load %arg2[%c6_26, %c0_27] : memref<9x64xf32, #tpu.memory_space<vmem>>, vector<1x64xf32>
    %43 = vector.shape_cast %42 : vector<1x64xf32> to vector<64xf32>
    %44 = vector.shape_cast %43 : vector<64xf32> to vector<1x1x64xf32>
    %45 = vector.broadcast %44 : vector<1x1x64xf32> to vector<1x8x64xf32>
    %46 = arith.mulf %41, %45 : vector<1x8x64xf32>
    %47 = arith.addf %40, %46 : vector<1x8x64xf32>
    %c0_28 = arith.constant 0 : index
    %c7 = arith.constant 7 : index
    %c0_29 = arith.constant 0 : index
    %48 = vector.load %arg1[%c0_28, %c7, %c0_29] : memref<1x16x64xf32, #tpu.memory_space<vmem>>, vector<1x8x64xf32>
    %c7_30 = arith.constant 7 : index
    %c0_31 = arith.constant 0 : index
    %49 = vector.load %arg2[%c7_30, %c0_31] : memref<9x64xf32, #tpu.memory_space<vmem>>, vector<1x64xf32>
    %50 = vector.shape_cast %49 : vector<1x64xf32> to vector<64xf32>
    %51 = vector.shape_cast %50 : vector<64xf32> to vector<1x1x64xf32>
    %52 = vector.broadcast %51 : vector<1x1x64xf32> to vector<1x8x64xf32>
    %53 = arith.mulf %48, %52 : vector<1x8x64xf32>
    %54 = arith.addf %47, %53 : vector<1x8x64xf32>
    %c0_32 = arith.constant 0 : index
    %c8 = arith.constant 8 : index
    %c0_33 = arith.constant 0 : index
    %55 = vector.load %arg1[%c0_32, %c8, %c0_33] : memref<1x16x64xf32, #tpu.memory_space<vmem>>, vector<1x8x64xf32>
    %c8_34 = arith.constant 8 : index
    %c0_35 = arith.constant 0 : index
    %56 = vector.load %arg2[%c8_34, %c0_35] : memref<9x64xf32, #tpu.memory_space<vmem>>, vector<1x64xf32>
    %57 = vector.shape_cast %56 : vector<1x64xf32> to vector<64xf32>
    %58 = vector.shape_cast %57 : vector<64xf32> to vector<1x1x64xf32>
    %59 = vector.broadcast %58 : vector<1x1x64xf32> to vector<1x8x64xf32>
    %60 = arith.mulf %55, %59 : vector<1x8x64xf32>
    %61 = arith.addf %54, %60 : vector<1x8x64xf32>
    %62 = vector.shape_cast %61 : vector<1x8x64xf32> to vector<8x64xf32>
    %c0_36 = arith.constant 0 : index
    %c0_37 = arith.constant 0 : index
    %63 = vector.load %arg3[%c0_36, %c0_37] : memref<64x128xf32, #tpu.memory_space<vmem>>, vector<64x128xf32>
    %cst = arith.constant dense<0.000000e+00> : vector<8x128xf32>
    %64 = tpu.matmul %62, %63, %cst {dimension_numbers = #tpu.dot_dimension_numbers<[1], [0], [0], [1], [0, 0, 1, 1], [], []>} : vector<8x64xf32>, vector<64x128xf32>, vector<8x128xf32> -> vector<8x128xf32>
    %c0_38 = arith.constant 0 : index
    %c0_39 = arith.constant 0 : index
    %65 = vector.load %arg4[%c0_38, %c0_39] : memref<1x128xf32, #tpu.memory_space<vmem>>, vector<1x128xf32>
    %66 = vector.broadcast %65 : vector<1x128xf32> to vector<8x128xf32>
    %67 = arith.addf %64, %66 : vector<8x128xf32>
    %cst_40 = arith.constant 0.000000e+00 : f32
    %68 = vector.broadcast %cst_40 : f32 to vector<8x128xf32>
    %69 = arith.maximumf %67, %68 : vector<8x128xf32>
    %70 = vector.shape_cast %69 : vector<8x128xf32> to vector<1x8x128xf32>
    %c0_41 = arith.constant 0 : index
    %c0_42 = arith.constant 0 : index
    %c0_43 = arith.constant 0 : index
    %71 = vector.load %arg5[%c0_41, %c0_42, %c0_43] : memref<1x8x128xf32, #tpu.memory_space<vmem>>, vector<1x8x128xf32>
    tpu.vector_store %arg5[%c0_41, %c0_42, %c0_43], %70 {strides = array<i32>} : memref<1x8x128xf32, #tpu.memory_space<vmem>>, vector<1x8x128xf32>,
    return
  }
  func.func @transform_0(%arg0: i32) -> (i32, i32, i32) {
    %c0_i32 = arith.constant 0 : i32
    %c0_i32_0 = arith.constant 0 : i32
    %c0_i32_1 = arith.constant 0 : i32
    return %arg0, %c0_i32, %c0_i32_0 : i32, i32, i32
  }
  func.func @transform_1(%arg0: i32) -> (i32, i32) {
    %c0_i32 = arith.constant 0 : i32
    %c0_i32_0 = arith.constant 0 : i32
    %c0_i32_1 = arith.constant 0 : i32
    return %c0_i32, %c0_i32_0 : i32, i32
  }
  func.func @transform_2(%arg0: i32) -> (i32, i32) {
    %c0_i32 = arith.constant 0 : i32
    %c0_i32_0 = arith.constant 0 : i32
    %c0_i32_1 = arith.constant 0 : i32
    return %c0_i32, %c0_i32_0 : i32, i32
  }
  func.func @transform_3(%arg0: i32) -> (i32, i32) {
    %c0_i32 = arith.constant 0 : i32
    %c0_i32_0 = arith.constant 0 : i32
    %c0_i32_1 = arith.constant 0 : i32
    return %c0_i32, %c0_i32_0 : i32, i32
  }
  func.func @transform_4(%arg0: i32) -> (i32, i32, i32) {
    %c0_i32 = arith.constant 0 : i32
    %c0_i32_0 = arith.constant 0 : i32
    %c0_i32_1 = arith.constant 0 : i32
    return %arg0, %c0_i32, %c0_i32_0 : i32, i32, i32
  }
}

</mosaic_0001>

<llo_original>
// kernel: separable_forward.1
$region0: #{separable_forward.1}
  #allocation0 [shape = 'u32[]', space=smem, size = 0x4, offset = 0x4, fixed_abs, tag = 'smem constant byte address 0x4 - core index']
  #allocation1 [shape = 'u32[72,128]{1,0:T(1,128)}', space=vmem, size = 0x9000, scoped, tag = 'internal scratch']
  %s0 = inlined_call_operand.vmem [shape: f32[2,16,64], index: 0, kind: input, shape index: {}]
  %s1 = inlined_call_operand.vmem [shape: f32[9,64], index: 1, kind: input, shape index: {}]
  %s2 = inlined_call_operand.vmem [shape: f32[64,128], index: 2, kind: input, shape index: {}]
  %s3 = inlined_call_operand.vmem [shape: f32[1,128], index: 3, kind: input, shape index: {}]
  %s4 = inlined_call_operand.vmem [shape: f32[2,8,128], index: 4, kind: output, shape index: {}]
  %s5 = sld [smem:[#allocation0]]
  $region49: #{separable_forward.1} parent=0
    _
  %s7 = ssub.s32 1, %s5
  %s8 = scalar_select 0, %s7, %s5
  loop: start=0, step=1, limit=4
  $region2: #{separable_forward.1} parent=0 // loop_pre_header
    _
  $region3: #{separable_forward.1} parent=0 // loop_header
    %s10 = sphi 0, %s14
    %p11 = scmp.ge.s32.totalorder %s10, 4
    %s20 = sphi 0, %s22
    %s23 = sphi 0, %s20
    %s24 = sphi 0, %s23
    %s40 = sphi 0, %s24
    %s44 = sphi 0, %s44
    %s46 = sphi 0, %s44
    %s47 = sphi 0, %s46
    %s61 = sphi 0, %s47
    %s65 = sphi 0, %s65
    %s67 = sphi 0, %s65
    %s68 = sphi 0, %s67
    %s82 = sphi 0, %s68
    %s86 = sphi 0, %s86
    %s88 = sphi 0, %s86
    %s89 = sphi 0, %s88
    %s103 = sphi 0, %s89
    %s109 = sphi 0, %s111
    %s112 = sphi 0, %s109
    %s113 = sphi 0, %s112
    %s129 = sphi 0, %s113
  $region4: #{separable_forward.1} parent=0 // loop_header_branch
    %13 = sbr.rel (%p11) target = $region8
  $region5: #{separable_forward.1} parent=0 // loop_body
    %s15 = ssub.s32 %s10, 1
    %s16 = ssub.s32 %s10, 2
    %s17 = sadd.s32 %s10, 1
    %s18 = ssub.s32 %s10, %s17
    %p19 = scmp.eq.s32.totalorder %s18, 0
    %s21 = sadd.s32 %s20, 1
    %s22 = scalar_select %p19, %s20, %s21
    %p25 = pneg %p19
    %p26 = scmp.eq.s32.totalorder %s10, 1
    %p27 = por %p25, %p26
    %p28 = scmp.ne.s32.totalorder %s20, %s23
    %p29 = scmp.eq.s32.totalorder %s10, 0
    %p30 = por %p28, %p29
    %p31 = scmp.ne.s32.totalorder %s20, %s23
    %p32 = scmp.eq.s32.totalorder %s15, 1
    %p33 = por %p31, %p32
    %p34 = scmp.ne.s32.totalorder %s23, %s24
    %p35 = scmp.eq.s32.totalorder %s15, 0
    %p36 = por %p34, %p35
    %p37 = scmp.ne.s32.totalorder %s23, %s24
    %p38 = scmp.eq.s32.totalorder %s16, 1
    %p39 = por %p37, %p38
    %p41 = scmp.ne.s32.totalorder %s24, %s40
    %p42 = scmp.eq.s32.totalorder %s16, 0
    %p43 = por %p41, %p42
    %s45 = sadd.s32 %s44, 1
    %p48 = scmp.eq.s32.totalorder %s10, 1
    %p49 = scmp.ne.s32.totalorder %s44, %s46
    %p50 = scmp.eq.s32.totalorder %s10, 0
    %p51 = por %p49, %p50
    %p52 = scmp.ne.s32.totalorder %s44, %s46
    %p53 = scmp.eq.s32.totalorder %s15, 1
    %p54 = por %p52, %p53
    %p55 = scmp.ne.s32.totalorder %s46, %s47
    %p56 = scmp.eq.s32.totalorder %s15, 0
    %p57 = por %p55, %p56
    %p58 = scmp.ne.s32.totalorder %s46, %s47
    %p59 = scmp.eq.s32.totalorder %s16, 1
    %p60 = por %p58, %p59
    %p62 = scmp.ne.s32.totalorder %s47, %s61
    %p63 = scmp.eq.s32.totalorder %s16, 0
    %p64 = por %p62, %p63
    %s66 = sadd.s32 %s65, 1
    %p69 = scmp.eq.s32.totalorder %s10, 1
    %p70 = scmp.ne.s32.totalorder %s65, %s67
    %p71 = scmp.eq.s32.totalorder %s10, 0
    %p72 = por %p70, %p71
    %p73 = scmp.ne.s32.totalorder %s65, %s67
    %p74 = scmp.eq.s32.totalorder %s15, 1
    %p75 = por %p73, %p74
    %p76 = scmp.ne.s32.totalorder %s67, %s68
    %p77 = scmp.eq.s32.totalorder %s15, 0
    %p78 = por %p76, %p77
    %p79 = scmp.ne.s32.totalorder %s67, %s68
    %p80 = scmp.eq.s32.totalorder %s16, 1
    %p81 = por %p79, %p80
    %p83 = scmp.ne.s32.totalorder %s68, %s82
    %p84 = scmp.eq.s32.totalorder %s16, 0
    %p85 = por %p83, %p84
    %s87 = sadd.s32 %s86, 1
    %p90 = scmp.eq.s32.totalorder %s10, 1
    %p91 = scmp.ne.s32.totalorder %s86, %s88
    %p92 = scmp.eq.s32.totalorder %s10, 0
    %p93 = por %p91, %p92
    %p94 = scmp.ne.s32.totalorder %s86, %s88
    %p95 = scmp.eq.s32.totalorder %s15, 1
    %p96 = por %p94, %p95
    %p97 = scmp.ne.s32.totalorder %s88, %s89
    %p98 = scmp.eq.s32.totalorder %s15, 0
    %p99 = por %p97, %p98
    %p100 = scmp.ne.s32.totalorder %s88, %s89
    %p101 = scmp.eq.s32.totalorder %s16, 1
    %p102 = por %p100, %p101
    %p104 = scmp.ne.s32.totalorder %s89, %s103
    %p105 = scmp.eq.s32.totalorder %s16, 0
    %p106 = por %p104, %p105
    %s107 = ssub.s32 %s10, %s17
    %p108 = scmp.eq.s32.totalorder %s107, 0
    %s110 = sadd.s32 %s109, 1
    %s111 = scalar_select %p108, %s109, %s110
    %p114 = pneg %p108
    %p115 = scmp.eq.s32.totalorder %s10, 1
    %p116 = por %p114, %p115
    %p117 = scmp.ne.s32.totalorder %s109, %s112
    %p118 = scmp.eq.s32.totalorder %s10, 0
    %p119 = por %p117, %p118
    %p120 = scmp.ne.s32.totalorder %s109, %s112
    %p121 = scmp.eq.s32.totalorder %s15, 1
    %p122 = por %p120, %p121
    %p123 = scmp.ne.s32.totalorder %s112, %s113
    %p124 = scmp.eq.s32.totalorder %s15, 0
    %p125 = por %p123, %p124
    %p126 = scmp.ne.s32.totalorder %s112, %s113
    %p127 = scmp.eq.s32.totalorder %s16, 1
    %p128 = por %p126, %p127
    %p130 = scmp.ne.s32.totalorder %s113, %s129
    %p131 = scmp.eq.s32.totalorder %s16, 0
    %p132 = por %p130, %p131
    %p133 = scmp.le.s32.totalorder 1, %s10
    %p134 = scmp.lt.s32.totalorder %s10, 3
    %p135 = pnand %p133, %p134
    %p136 = pneg %p135
    // Predicated region
    $region9: #{separable_forward.1} parent=5 // pred_check
      _
    $region10: #{separable_forward.1} parent=5 // pred_check_branch
      %138 = sbr.rel (%p135) target = $region12
    $region11: #{separable_forward.1} parent=5 // pred_region
      %s139 = ssub.s32 %s10, 1
      // Predicated region
      $region13: #{separable_forward.1} parent=11 // pred_check
        %p140 = pneg %p57
      $region14: #{separable_forward.1} parent=11 // pred_check_branch
        %142 = sbr.rel (%p140) target = $region16
      $region15: #{separable_forward.1} parent=11 // pred_region
        _
      $region16: #{separable_forward.1} parent=11 // pred_fallthru
        _
      // Predicated region
      $region17: #{separable_forward.1} parent=11 // pred_check
        %p143 = pneg %p78
      $region18: #{separable_forward.1} parent=11 // pred_check_branch
        %145 = sbr.rel (%p143) target = $region20
      $region19: #{separable_forward.1} parent=11 // pred_region
        _
      $region20: #{separable_forward.1} parent=11 // pred_fallthru
        _
      // Predicated region
      $region21: #{separable_forward.1} parent=11 // pred_check
        %p146 = pneg %p99
      $region22: #{separable_forward.1} parent=11 // pred_check_branch
        %148 = sbr.rel (%p146) target = $region24
      $region23: #{separable_forward.1} parent=11 // pred_region
        _
      $region24: #{separable_forward.1} parent=11 // pred_fallthru
        _
    $region12: #{separable_forward.1} parent=5 // pred_fallthru
      _
    %p149 = scmp.lt.s32.totalorder %s10, 2
    // Predicated region
    $region25: #{separable_forward.1} parent=5 // pred_check
      %p150 = pneg %p149
    $region26: #{separable_forward.1} parent=5 // pred_check_branch
      %152 = sbr.rel (%p150) target = $region28
    $region27: #{separable_forward.1} parent=5 // pred_region
      // Predicated region
      $region29: #{separable_forward.1} parent=27 // pred_check
        %p153 = pneg %p30
      $region30: #{separable_forward.1} parent=27 // pred_check_branch
        %155 = sbr.rel (%p153) target = $region32
      $region31: #{separable_forward.1} parent=27 // pred_region
        %p156 = scmp.lt.s32.totalorder %s10, 1
        %s157 = scalar_select %p156, %s10, 1
        %s158 = smul.addr %s157, 2
        %s159 = smul.addr %s158, 8
        %s160 = scalar_lea.vmem %s0, %s159
      $region32: #{separable_forward.1} parent=27 // pred_fallthru
        _
    $region28: #{separable_forward.1} parent=5 // pred_fallthru
      _
    %p161 = scmp.le.s32.totalorder 1, %s10
    %p162 = scmp.lt.s32.totalorder %s10, 3
    %p163 = pnand %p161, %p162
    %p164 = pneg %p163
    // Predicated region
    $region33: #{separable_forward.1} parent=5 // pred_check
      _
    $region34: #{separable_forward.1} parent=5 // pred_check_branch
      %166 = sbr.rel (%p163) target = $region36
    $region35: #{separable_forward.1} parent=5 // pred_region
      %s167 = ssub.s32 %s10, 1
      %p168 = scmp.lt.s32.totalorder %s15, 1
      %s169 = scalar_select %p168, %s15, 1
      %s170 = smul.addr %s169, 2
      %s171 = smul.addr %s170, 8
      %s172 = scalar_lea.vmem %s0, %s171
      %p173 = pneg %p36
      %p174 = pneg %p33
      %p175 = pneg %p57
      %p176 = pneg %p54
      %p177 = pneg %p78
      %p178 = pneg %p75
      %p179 = pneg %p99
      %p180 = pneg %p96
      %p181 = pneg %p125
      %p182 = pneg %p122
      %p183 = scmp.lt.s32.totalorder %s15, 1
      %s184 = scalar_select %p183, %s15, 1
      %s185 = smul.addr %s184, 8
      %s186 = scalar_lea.vmem %s4, %s185
      %p187 = scmp.lt.s32.totalorder %s15, 1
      %s188 = scalar_select %p187, %s15, 1
      %s189 = smul.addr %s188, 2
      %s190 = smul.addr %s189, 8
      %s191 = scalar_lea.vmem %s0, %s190
      %p192 = scmp.lt.s32.totalorder %s15, 1
      %s193 = scalar_select %p192, %s15, 1
      %s194 = smul.addr %s193, 8
      %s195 = scalar_lea.vmem %s4, %s194
      %v196 = vld [vmem:[%s191] sm:$0xff]
      %v197 = vld [vmem:[%s1] sm:$0x1]
      %v198 = vperm.slane %v197, 0
      %v199 = vmul.f32 %v196, %v198
      %v200 = vld [vmem:[%s191 + $0x1] sm:$0xff]
      %v201 = vld [vmem:[%s1 + $0x1] sm:$0x1]
      %v202 = vperm.slane %v201, 0
      %v203 = vmul.f32 %v200, %v202
      %v204 = vadd.f32 %v199, %v203
      %v205 = vld [vmem:[%s191 + $0x2] sm:$0xff]
      %v206 = vld [vmem:[%s1 + $0x2] sm:$0x1]
      %v207 = vperm.slane %v206, 0
      %v208 = vmul.f32 %v205, %v207
      %v209 = vadd.f32 %v204, %v208
      %v210 = vld [vmem:[%s191 + $0x3] sm:$0xff]
      %v211 = vld [vmem:[%s1 + $0x3] sm:$0x1]
      %v212 = vperm.slane %v211, 0
      %v213 = vmul.f32 %v210, %v212
      %v214 = vadd.f32 %v209, %v213
      %v215 = vld [vmem:[%s191 + $0x4] sm:$0xff]
      %v216 = vld [vmem:[%s1 + $0x4] sm:$0x1]
      %v217 = vperm.slane %v216, 0
      %v218 = vmul.f32 %v215, %v217
      %v219 = vadd.f32 %v214, %v218
      %v220 = vld [vmem:[%s191 + $0x5] sm:$0xff]
      %v221 = vld [vmem:[%s1 + $0x5] sm:$0x1]
      %v222 = vperm.slane %v221, 0
      %v223 = vmul.f32 %v220, %v222
      %v224 = vadd.f32 %v219, %v223
      %v225 = vld [vmem:[%s191 + $0x6] sm:$0xff]
      %v226 = vld [vmem:[%s1 + $0x6] sm:$0x1]
      %v227 = vperm.slane %v226, 0
      %v228 = vmul.f32 %v225, %v227
      %v229 = vadd.f32 %v224, %v228
      %v230 = vld [vmem:[%s191 + $0x7] sm:$0xff]
      %v231 = vld [vmem:[%s1 + $0x7] sm:$0x1]
      %v232 = vperm.slane %v231, 0
      %v233 = vmul.f32 %v230, %v232
      %v234 = vadd.f32 %v229, %v233
      %v235 = vld [vmem:[%s191 + $0x8] sm:$0xff]
      %v236 = vld [vmem:[%s1 + $0x8] sm:$0x1]
      %v237 = vperm.slane %v236, 0
      %v238 = vmul.f32 %v235, %v237
      %v239 = vadd.f32 %v234, %v238
      %v240 = vld [vmem:[%s2] sm:$0xff]
      %v241 = vld [vmem:[%s2 + $0x8] sm:$0xff]
      %v242 = vld [vmem:[%s2 + $0x10] sm:$0xff]
      %v243 = vld [vmem:[%s2 + $0x18] sm:$0xff]
      %v244 = vld [vmem:[%s2 + $0x20] sm:$0xff]
      %v245 = vld [vmem:[%s2 + $0x28] sm:$0xff]
      %v246 = vld [vmem:[%s2 + $0x30] sm:$0xff]
      %v247 = vld [vmem:[%s2 + $0x38] sm:$0xff]
      %v248 = vld [vmem:[%s3] sm:$0x1]
      %v250 = vperm.slane %v248, 0
      %vm252 = vcmask 523264
      %v254 = vsel %vm252, %v239, 0
      %256 = vmatpush.msra.mxu0 0.0
      %257 = vmatpush.msra.mxu0 0.0
      %258 = vmatpush.msra.mxu0 0.0
      %259 = vmatpush.msra.mxu0 0.0
      %260 = vmatpush.msra.mxu0 0.0
      %261 = vmatpush.msra.mxu0 0.0
      %262 = vmatpush.msra.mxu0 0.0
      %263 = vmatpush.msra.mxu0 0.0
      %264 = vmatpush.msra.mxu0 %v247
      %265 = vmatpush.msra.mxu0 %v246
      %266 = vmatpush.msra.mxu0 %v245
      %267 = vmatpush.msra.mxu0 %v244
      %268 = vmatpush.msra.mxu0 %v243
      %269 = vmatpush.msra.mxu0 %v242
      %270 = vmatpush.msra.mxu0 %v241
      %271 = vmatpush.msra.mxu0 %v240
      %272 = vmatmul.f32.gmra.mxu0 %v254
      %v273 = vpop.f32.mrf.mxu0
      %v274 = vadd.f32 %v250, %v273
      %275 = vdwg.mxu0
      %v276 = vmax.f32 %v274, 0.0
      %277 = vst [vmem:[%s195] sm:$0xff] %v276
      %p278 = scmp.lt.s32.totalorder %s15, 1
      %s279 = scalar_select %p278, %s15, 1
      %s280 = smul.addr %s279, 8
      %s281 = scalar_lea.vmem %s4, %s280
      // Predicated region
      $region37: #{separable_forward.1} parent=35 // pred_check
        %p282 = pneg %p122
      $region38: #{separable_forward.1} parent=35 // pred_check_branch
        %284 = sbr.rel (%p282) target = $region40
      $region39: #{separable_forward.1} parent=35 // pred_region
        _
      $region40: #{separable_forward.1} parent=35 // pred_fallthru
        _
    $region36: #{separable_forward.1} parent=5 // pred_fallthru
      _
    %p285 = scmp.le.s32.totalorder 2, %s10
    // Predicated region
    $region41: #{separable_forward.1} parent=5 // pred_check
      %p286 = pneg %p285
    $region42: #{separable_forward.1} parent=5 // pred_check_branch
      %288 = sbr.rel (%p286) target = $region44
    $region43: #{separable_forward.1} parent=5 // pred_region
      %s289 = ssub.s32 %s10, 2
      // Predicated region
      $region45: #{separable_forward.1} parent=43 // pred_check
        %p290 = pneg %p128
      $region46: #{separable_forward.1} parent=43 // pred_check_branch
        %292 = sbr.rel (%p290) target = $region48
      $region47: #{separable_forward.1} parent=43 // pred_region
        %p293 = scmp.lt.s32.totalorder %s16, 1
        %s294 = scalar_select %p293, %s16, 1
        %s295 = smul.addr %s294, 8
        %s296 = scalar_lea.vmem %s4, %s295
      $region48: #{separable_forward.1} parent=43 // pred_fallthru
        _
    $region44: #{separable_forward.1} parent=5 // pred_fallthru
      _
  $region6: #{separable_forward.1} parent=0 // loop_footer
    %s14 = sadd.s32 1, %s10
  $region7: #{separable_forward.1} parent=0 // loop_footer_branch
    %9 = sbr.rel target = $region3
  $region8: #{separable_forward.1} parent=0 // loop_exit
    _

</llo_original>
